<compile_context>
chip_gen: v7x
topology: tpu7x:2x2x1
jax: 0.10.0
libtpu: 0.0.40
codegen_flags: <defaults>
</compile_context>

<pallas_src>
import jax
import jax.numpy as jnp
from jax.experimental import pallas as pl
from jax.experimental.pallas import tpu as pltpu


def _round_up(x, m):
    return ((x + m - 1) // m) * m


def _bbox_head_kernel(x_ref, w_ref, b_ref, o_ref):
    # x_ref: (C, t_hw)  NCHW activation tile (lane dim = flattened H*W, dense)
    # w_ref: (C, A4)    1x1-conv weight in matmul form
    # b_ref: (1, A4)    bias
    # o_ref: (t_hw, A4) NHWC-ordered output tile
    acc = jax.lax.dot_general(
        x_ref[...],
        w_ref[...],
        dimension_numbers=(((0,), (0,)), ((), ())),  # contract channel axis
        preferred_element_type=jnp.float32,
    )
    o_ref[...] = (acc + b_ref[...].astype(jnp.float32)).astype(o_ref.dtype)


def _pick_spatial_tile(hw, c, itemsize, target, vmem_budget_bytes):
    # Per spatial position: double-buffered input (2*C) + double-buffered,
    # lane-padded output (2*128) elements in VMEM.
    per_pos = 2 * (c + 128) * itemsize
    t_fit = max(128, (vmem_budget_bytes // per_pos) // 128 * 128)
    t_cap = max(128, min(target, _round_up(hw, 128)))
    return min(t_cap, t_fit)


def bbox_head_forward(x_nchw, weight, bias, *, num_anchors,
                      spatial_tile=2048, vmem_budget_bytes=8 * 1024 * 1024):
    """x_nchw: (N, C, H, W)
    weight:   (C, A*4)   (PyTorch's (A*4, C, 1, 1) squeezed + transposed)
    bias:     (A*4,)
    returns:  (N, H*W*A, 4)   == conv1x1(x).permute(0,2,3,1).view(N, -1, 4)
    """
    N, C, H, W = x_nchw.shape
    A4 = num_anchors * 4
    assert weight.shape == (C, A4)
    assert bias.shape == (A4,)

    HW = H * W
    x3 = x_nchw.reshape(N, C, HW)      # free: merges trailing contiguous dims
    b2d = bias.reshape(1, A4)

    itemsize = jnp.dtype(x_nchw.dtype).itemsize
    t_hw = _pick_spatial_tile(HW, C, itemsize, spatial_tile, vmem_budget_bytes)
    grid = (N, pl.cdiv(HW, t_hw))

    cost = pl.CostEstimate(
        flops=2 * N * HW * C * A4,
        transcendentals=0,
        bytes_accessed=itemsize * (N * C * HW + C * A4 + A4 + N * HW * A4),
    )

    out = pl.pallas_call(
        _bbox_head_kernel,
        out_shape=jax.ShapeDtypeStruct((N, HW, A4), x_nchw.dtype),
        grid_spec=pltpu.PrefetchScalarGridSpec(
            num_scalar_prefetch=0,
            grid=grid,
            in_specs=[
                # NCHW activation tile (batch dim squeezed): kernel sees (C, t_hw).
                pl.BlockSpec((None, C, t_hw), lambda n, j: (n, 0, j)),
                # Full weight / bias, resident across the whole grid.
                pl.BlockSpec((C, A4), lambda n, j: (0, 0)),
                pl.BlockSpec((1, A4), lambda n, j: (0, 0)),
            ],
            out_specs=pl.BlockSpec((None, t_hw, A4), lambda n, j: (n, j, 0)),
        ),
        compiler_params=pltpu.CompilerParams(
            dimension_semantics=("parallel", "parallel"),
        ),
        cost_estimate=cost,
    )(x3, weight, b2d)

    # NHWC-ordered (N, H*W, A*4) -> (N, H*W*A, 4): pure (free) reshape,
    # identical to permute(0,2,3,1).contiguous().view(N, -1, 4).
    return out.reshape(N, HW * num_anchors, 4)


if __name__ == "__main__":
    # Small shapes consistent with the module (inchannels=C, num_anchors=3).
    N, C, H, W = 2, 32, 16, 16
    num_anchors = 3
    A4 = num_anchors * 4

    key = jax.random.PRNGKey(0)
    kx, kw, kb = jax.random.split(key, 3)

    x = jax.random.normal(kx, (N, C, H, W), dtype=jnp.float32)
    # PyTorch weight shape is (A*4, C, 1, 1); we store its matmul form (C, A*4).
    weight = jax.random.normal(kw, (C, A4), dtype=jnp.float32) * 0.05
    bias = jax.random.normal(kb, (A4,), dtype=jnp.float32) * 0.05

    out = bbox_head_forward(x, weight, bias, num_anchors=num_anchors)
    out = jax.block_until_ready(out)

    # Reference check against plain JAX (same semantics as the PyTorch forward).
    ref = (
        jnp.einsum("nchw,co->nhwo", x, weight) + bias
    ).reshape(N, H * W * num_anchors, 4)
    assert out.shape == (N, H * W * num_anchors, 4)
    assert jnp.allclose(out, ref, atol=1e-4, rtol=1e-4)

    print("KERNEL_OK")
</pallas_src>

<mosaic_0001>
module attributes {stable_mosaic.version = 11 : i64} {
  func.func @_bbox_head_kernel(%arg0: i32, %arg1: i32, %arg2: memref<1x32x256xf32, #tpu.memory_space<vmem>>, %arg3: memref<32x12xf32, #tpu.memory_space<vmem>>, %arg4: memref<1x12xf32, #tpu.memory_space<vmem>>, %arg5: memref<1x256x12xf32, #tpu.memory_space<vmem>>) attributes {dimension_semantics = [#tpu.dimension_semantics<parallel>, #tpu.dimension_semantics<parallel>], iteration_bounds = array<i64: 2, 1>, scalar_prefetch = 0 : i64, scratch_operands = 0 : i64, tpu.core_type = #tpu.core_type<tc>, window_params = [{transform_indices = @transform_0, window_bounds = array<i64: 1, 32, 256>}, {pipeline_mode = #tpu.pipeline_mode<synchronous>, transform_indices = @transform_1, window_bounds = array<i64: 32, 12>}, {pipeline_mode = #tpu.pipeline_mode<synchronous>, transform_indices = @transform_2, window_bounds = array<i64: 1, 12>}, {transform_indices = @transform_3, window_bounds = array<i64: 1, 256, 12>}]} {
    %c0 = arith.constant 0 : index
    %c0_0 = arith.constant 0 : index
    %c0_1 = arith.constant 0 : index
    %0 = vector.load %arg2[%c0, %c0_0, %c0_1] : memref<1x32x256xf32, #tpu.memory_space<vmem>>, vector<1x32x256xf32>
    %1 = vector.shape_cast %0 : vector<1x32x256xf32> to vector<32x256xf32>
    %c0_2 = arith.constant 0 : index
    %c0_3 = arith.constant 0 : index
    %2 = vector.load %arg3[%c0_2, %c0_3] : memref<32x12xf32, #tpu.memory_space<vmem>>, vector<32x12xf32>
    %cst = arith.constant dense<0.000000e+00> : vector<256x12xf32>
    %3 = tpu.matmul %1, %2, %cst {dimension_numbers = #tpu.dot_dimension_numbers<[0], [0], [1], [1], [0, 1, 1, 1], [], []>} : vector<32x256xf32>, vector<32x12xf32>, vector<256x12xf32> -> vector<256x12xf32>
    %c0_4 = arith.constant 0 : index
    %c0_5 = arith.constant 0 : index
    %4 = vector.load %arg4[%c0_4, %c0_5] : memref<1x12xf32, #tpu.memory_space<vmem>>, vector<1x12xf32>
    %5 = vector.broadcast %4 : vector<1x12xf32> to vector<256x12xf32>
    %6 = arith.addf %3, %5 : vector<256x12xf32>
    %c0_6 = arith.constant 0 : index
    %c0_7 = arith.constant 0 : index
    %c0_8 = arith.constant 0 : index
    %7 = vector.load %arg5[%c0_6, %c0_7, %c0_8] : memref<1x256x12xf32, #tpu.memory_space<vmem>>, vector<1x256x12xf32>
    %8 = vector.shape_cast %7 : vector<1x256x12xf32> to vector<256x12xf32>
    %9 = vector.shape_cast %6 : vector<256x12xf32> to vector<1x256x12xf32>
    tpu.vector_store %arg5[%c0_6, %c0_7, %c0_8], %9 {strides = array<i32>} : memref<1x256x12xf32, #tpu.memory_space<vmem>>, vector<1x256x12xf32>,
    return
  }
  func.func @transform_0(%arg0: i32, %arg1: i32) -> (i32, i32, i32) {
    %c0_i32 = arith.constant 0 : i32
    %c0_i32_0 = arith.constant 0 : i32
    return %arg0, %c0_i32, %arg1 : i32, i32, i32
  }
  func.func @transform_1(%arg0: i32, %arg1: i32) -> (i32, i32) {
    %c0_i32 = arith.constant 0 : i32
    %c0_i32_0 = arith.constant 0 : i32
    %c0_i32_1 = arith.constant 0 : i32
    return %c0_i32, %c0_i32_0 : i32, i32
  }
  func.func @transform_2(%arg0: i32, %arg1: i32) -> (i32, i32) {
    %c0_i32 = arith.constant 0 : i32
    %c0_i32_0 = arith.constant 0 : i32
    %c0_i32_1 = arith.constant 0 : i32
    return %c0_i32, %c0_i32_0 : i32, i32
  }
  func.func @transform_3(%arg0: i32, %arg1: i32) -> (i32, i32, i32) {
    %c0_i32 = arith.constant 0 : i32
    %c0_i32_0 = arith.constant 0 : i32
    return %arg0, %arg1, %c0_i32 : i32, i32, i32
  }
}

</mosaic_0001>

<llo_original>
// kernel: tpu_custom_call.1
$region0: #{tpu_custom_call.1}
  #allocation0 [shape = 'u32[]', space=smem, size = 0x4, offset = 0x4, fixed_abs, tag = 'smem constant byte address 0x4 - core index']
  #allocation1 [shape = 'u32[144,128]{1,0:T(1,128)}', space=vmem, size = 0x12000, scoped, tag = 'internal scratch']
  %s0 = inlined_call_operand.hbm [shape: f32[2,32,256], index: 0, kind: input, shape index: {}]
  %s1 = inlined_call_operand.vmem [shape: f32[32,12], index: 1, kind: input, shape index: {}]
  %s2 = inlined_call_operand.vmem [shape: f32[1,12], index: 2, kind: input, shape index: {}]
  %s3 = inlined_call_operand.vmem [shape: f32[2,256,12], index: 3, kind: output, shape index: {}]
  %s4 = sld [smem:[#allocation0]]
  $region49: #{tpu_custom_call.1} parent=0
    _
  %s6 = ssub.s32 1, %s4
  %s7 = scalar_select 0, %s6, %s4
  $region1: #{tpu_custom_call.1} parent=0
    #allocation2 [shape = 'u8[65536]{0}', space=vmem, size = 0x10000, scoped, tag = 'input window, operand 0']
    #allocation3 [shape = 's32[2]{0}', space=sflag, size = 0x8, scoped, tag = 'scoped memory for tpu_custom_call.1']
    %8 = vsyncpa [#allocation3], 0
    %s9 = scalar_lea.sflag [#allocation3], 1
    %10 = vsyncpa %s9, 0
    loop: start=0, step=1, limit=4
    $region2: #{tpu_custom_call.1} parent=1 // loop_pre_header
      _
    $region3: #{tpu_custom_call.1} parent=1 // loop_header
      %s12 = sphi 0, %s16
      %p13 = scmp.ge.s32.totalorder %s12, 4
      %s19 = sphi 0, %s31
      %s20 = sphi 0, %s27
      %s21 = sphi 0, %s19
      %s22 = sphi 0, %s20
      %s23 = sphi 0, %s21
      %s24 = sphi 0, %s22
      %s36 = sphi 0, %s38
      %s39 = sphi 0, %s36
      %s40 = sphi 0, %s39
      %s56 = sphi 0, %s40
      %s60 = sphi 0, %s60
      %s62 = sphi 0, %s60
      %s63 = sphi 0, %s62
      %s77 = sphi 0, %s63
      %s81 = sphi 0, %s81
      %s83 = sphi 0, %s81
      %s84 = sphi 0, %s83
      %s98 = sphi 0, %s84
      %s106 = sphi 0, %s108
      %s109 = sphi 0, %s106
      %s110 = sphi 0, %s109
      %s126 = sphi 0, %s110
    $region4: #{tpu_custom_call.1} parent=1 // loop_header_branch
      %15 = sbr.rel (%p13) target = $region8
    $region5: #{tpu_custom_call.1} parent=1 // loop_body
      %s17 = ssub.s32 %s12, 1
      %s18 = ssub.s32 %s12, 2
      %s25 = sadd.s32 1, %s20
      %p26 = scmp.ge.s32.totalorder %s25, 1
      %s27 = scalar_select %p26, 0, %s25
      %s28 = sadd.s32 1, %s19
      %s29 = scalar_select %p26, %s28, %s19
      %p30 = scmp.ge.s32.totalorder %s29, 2
      %s31 = scalar_select %p30, 0, %s29
      %s32 = ssub.s32 %s19, %s31
      %s33 = ssub.s32 %s20, %s27
      %s34 = sor.u32 %s32, %s33
      %p35 = scmp.eq.s32.totalorder %s34, 0
      %s37 = sadd.s32 %s36, 1
      %s38 = scalar_select %p35, %s36, %s37
      %p41 = pneg %p35
      %p42 = scmp.eq.s32.totalorder %s12, 1
      %p43 = por %p41, %p42
      %p44 = scmp.ne.s32.totalorder %s36, %s39
      %p45 = scmp.eq.s32.totalorder %s12, 0
      %p46 = por %p44, %p45
      %p47 = scmp.ne.s32.totalorder %s36, %s39
      %p48 = scmp.eq.s32.totalorder %s17, 1
      %p49 = por %p47, %p48
      %p50 = scmp.ne.s32.totalorder %s39, %s40
      %p51 = scmp.eq.s32.totalorder %s17, 0
      %p52 = por %p50, %p51
      %p53 = scmp.ne.s32.totalorder %s39, %s40
      %p54 = scmp.eq.s32.totalorder %s18, 1
      %p55 = por %p53, %p54
      %p57 = scmp.ne.s32.totalorder %s40, %s56
      %p58 = scmp.eq.s32.totalorder %s18, 0
      %p59 = por %p57, %p58
      %s61 = sadd.s32 %s60, 1
      %p64 = scmp.eq.s32.totalorder %s12, 1
      %p65 = scmp.ne.s32.totalorder %s60, %s62
      %p66 = scmp.eq.s32.totalorder %s12, 0
      %p67 = por %p65, %p66
      %p68 = scmp.ne.s32.totalorder %s60, %s62
      %p69 = scmp.eq.s32.totalorder %s17, 1
      %p70 = por %p68, %p69
      %p71 = scmp.ne.s32.totalorder %s62, %s63
      %p72 = scmp.eq.s32.totalorder %s17, 0
      %p73 = por %p71, %p72
      %p74 = scmp.ne.s32.totalorder %s62, %s63
      %p75 = scmp.eq.s32.totalorder %s18, 1
      %p76 = por %p74, %p75
      %p78 = scmp.ne.s32.totalorder %s63, %s77
      %p79 = scmp.eq.s32.totalorder %s18, 0
      %p80 = por %p78, %p79
      %s82 = sadd.s32 %s81, 1
      %p85 = scmp.eq.s32.totalorder %s12, 1
      %p86 = scmp.ne.s32.totalorder %s81, %s83
      %p87 = scmp.eq.s32.totalorder %s12, 0
      %p88 = por %p86, %p87
      %p89 = scmp.ne.s32.totalorder %s81, %s83
      %p90 = scmp.eq.s32.totalorder %s17, 1
      %p91 = por %p89, %p90
      %p92 = scmp.ne.s32.totalorder %s83, %s84
      %p93 = scmp.eq.s32.totalorder %s17, 0
      %p94 = por %p92, %p93
      %p95 = scmp.ne.s32.totalorder %s83, %s84
      %p96 = scmp.eq.s32.totalorder %s18, 1
      %p97 = por %p95, %p96
      %p99 = scmp.ne.s32.totalorder %s84, %s98
      %p100 = scmp.eq.s32.totalorder %s18, 0
      %p101 = por %p99, %p100
      %s102 = ssub.s32 %s19, %s31
      %s103 = ssub.s32 %s20, %s27
      %s104 = sor.u32 %s102, %s103
      %p105 = scmp.eq.s32.totalorder %s104, 0
      %s107 = sadd.s32 %s106, 1
      %s108 = scalar_select %p105, %s106, %s107
      %p111 = pneg %p105
      %p112 = scmp.eq.s32.totalorder %s12, 1
      %p113 = por %p111, %p112
      %p114 = scmp.ne.s32.totalorder %s106, %s109
      %p115 = scmp.eq.s32.totalorder %s12, 0
      %p116 = por %p114, %p115
      %p117 = scmp.ne.s32.totalorder %s106, %s109
      %p118 = scmp.eq.s32.totalorder %s17, 1
      %p119 = por %p117, %p118
      %p120 = scmp.ne.s32.totalorder %s109, %s110
      %p121 = scmp.eq.s32.totalorder %s17, 0
      %p122 = por %p120, %p121
      %p123 = scmp.ne.s32.totalorder %s109, %s110
      %p124 = scmp.eq.s32.totalorder %s18, 1
      %p125 = por %p123, %p124
      %p127 = scmp.ne.s32.totalorder %s110, %s126
      %p128 = scmp.eq.s32.totalorder %s18, 0
      %p129 = por %p127, %p128
      %p130 = scmp.le.s32.totalorder 1, %s12
      %p131 = scmp.lt.s32.totalorder %s12, 3
      %p132 = pnand %p130, %p131
      %p133 = pneg %p132
      // Predicated region
      $region9: #{tpu_custom_call.1} parent=5 // pred_check
        _
      $region10: #{tpu_custom_call.1} parent=5 // pred_check_branch
        %135 = sbr.rel (%p132) target = $region12
      $region11: #{tpu_custom_call.1} parent=5 // pred_region
        %s136 = ssub.s32 %s12, 1
        // Predicated region
        $region13: #{tpu_custom_call.1} parent=11 // pred_check
          %p137 = pneg %p73
        $region14: #{tpu_custom_call.1} parent=11 // pred_check_branch
          %139 = sbr.rel (%p137) target = $region16
        $region15: #{tpu_custom_call.1} parent=11 // pred_region
          _
        $region16: #{tpu_custom_call.1} parent=11 // pred_fallthru
          _
        // Predicated region
        $region17: #{tpu_custom_call.1} parent=11 // pred_check
          %p140 = pneg %p94
        $region18: #{tpu_custom_call.1} parent=11 // pred_check_branch
          %142 = sbr.rel (%p140) target = $region20
        $region19: #{tpu_custom_call.1} parent=11 // pred_region
          _
        $region20: #{tpu_custom_call.1} parent=11 // pred_fallthru
          _
      $region12: #{tpu_custom_call.1} parent=5 // pred_fallthru
        _
      %p143 = scmp.lt.s32.totalorder %s12, 2
      // Predicated region
      $region21: #{tpu_custom_call.1} parent=5 // pred_check
        %p144 = pneg %p143
      $region22: #{tpu_custom_call.1} parent=5 // pred_check_branch
        %146 = sbr.rel (%p144) target = $region24
      $region23: #{tpu_custom_call.1} parent=5 // pred_region
        // Predicated region
        $region25: #{tpu_custom_call.1} parent=23 // pred_check
          %p147 = pneg %p46
        $region26: #{tpu_custom_call.1} parent=23 // pred_check_branch
          %149 = sbr.rel (%p147) target = $region28
        $region27: #{tpu_custom_call.1} parent=23 // pred_region
          %s150 = sand.u32 %s36, 1
          %s151 = scalar_lea.sflag [#allocation3], %s150
          %s152 = sand.u32 %s36, 1
          %s153 = smul.addr %s152, 64
          %s154 = scalar_lea.vmem [#allocation2], %s153
          %s155 = smul.u32 2, %s20
          %s157 = ssub.s32 1024, 1024
          %158 = vsyncadd %s151, %s157
          %s159 = smul.addr %s19, 8
          %s160 = sadd.s32 %s155, %s159
          %s161 = smul.addr %s160, 128
          %s162 = scalar_lea.hbm %s0, %s161
          %s163 = sshll.u32 %s154, 4
          %s164 = int_to_ptr.vmem [resolvable:$true] %s163
          %169 = dma.hbm_to_vmem [thread:$0]  %s162, 1024, %s164, %s151, 256, 256, 16
        $region28: #{tpu_custom_call.1} parent=23 // pred_fallthru
          _
      $region24: #{tpu_custom_call.1} parent=5 // pred_fallthru
        _
      %p170 = scmp.le.s32.totalorder 1, %s12
      %p171 = scmp.lt.s32.totalorder %s12, 3
      %p172 = pnand %p170, %p171
      %p173 = pneg %p172
      // Predicated region
      $region29: #{tpu_custom_call.1} parent=5 // pred_check
        _
      $region30: #{tpu_custom_call.1} parent=5 // pred_check_branch
        %175 = sbr.rel (%p172) target = $region32
      $region31: #{tpu_custom_call.1} parent=5 // pred_region
        %s176 = ssub.s32 %s12, 1
        %s177 = sand.u32 %s39, 1
        %s178 = scalar_lea.sflag [#allocation3], %s177
        %s179 = sand.u32 %s39, 1
        %s180 = smul.addr %s179, 64
        %s181 = scalar_lea.vmem [#allocation2], %s180
        // Predicated region
        $region33: #{tpu_custom_call.1} parent=31 // pred_check
          %p182 = pneg %p52
        $region34: #{tpu_custom_call.1} parent=31 // pred_check_branch
          %184 = sbr.rel (%p182) target = $region36
        $region35: #{tpu_custom_call.1} parent=31 // pred_region
          %185 = dma.done %s178, 1024
        $region36: #{tpu_custom_call.1} parent=31 // pred_fallthru
          _
        %s186 = sand.u32 %s39, 1
        %s187 = scalar_lea.sflag [#allocation3], %s186
        %s188 = sand.u32 %s39, 1
        %s189 = smul.addr %s188, 64
        %s190 = scalar_lea.vmem [#allocation2], %s189
        %p191 = pneg %p52
        %p192 = pneg %p49
        %p193 = pneg %p73
        %p194 = pneg %p70
        %p195 = pneg %p94
        %p196 = pneg %p91
        %p197 = pneg %p122
        %p198 = pneg %p119
        %s199 = smul.u32 32, %s22
        %p200 = scmp.lt.s32.totalorder %s21, 1
        %s201 = scalar_select %p200, %s21, 1
        %p202 = scmp.lt.s32.totalorder %s199, 31
        %s203 = scalar_select %p202, %s199, 31
        %s204 = smul.addr %s201, 32
        %s205 = sadd.s32 %s203, %s204
        %s206 = smul.addr %s205, 8
        %s207 = scalar_lea.vmem %s3, %s206
        %s208 = smul.u32 2, %s22
        %s209 = smul.u32 32, %s22
        %p210 = scmp.lt.s32.totalorder %s21, 1
        %s211 = scalar_select %p210, %s21, 1
        %p212 = scmp.lt.s32.totalorder %s209, 31
        %s213 = scalar_select %p212, %s209, 31
        %s214 = smul.addr %s211, 32
        %s215 = sadd.s32 %s213, %s214
        %s216 = smul.addr %s215, 8
        %s217 = scalar_lea.vmem %s3, %s216
        %s218 = smul.u32 32, %s22
        %v219 = vld [vmem:[%s181] sm:$0xff]
        %v220 = vld [vmem:[%s181 + $0x8] sm:$0xff]
        %v221 = vld [vmem:[%s181 + $0x10] sm:$0xff]
        %v222 = vld [vmem:[%s181 + $0x18] sm:$0xff]
        %v223 = vld [vmem:[%s181 + $0x20] sm:$0xff]
        %v224 = vld [vmem:[%s181 + $0x28] sm:$0xff]
        %v225 = vld [vmem:[%s181 + $0x30] sm:$0xff]
        %v226 = vld [vmem:[%s181 + $0x38] sm:$0xff]
        %v227 = vld [vmem:[%s1] sm:$0xff]
        %v228 = vld [vmem:[%s1 + $0x8] sm:$0xff]
        %v229 = vld [vmem:[%s1 + $0x10] sm:$0xff]
        %v230 = vld [vmem:[%s1 + $0x18] sm:$0xff]
        %v231 = vld [vmem:[%s2] sm:$0x1]
        %v233 = vlaneseq
        %v234 = vshrl.u32 %v233, 7
        %v235 = vsub.s32 0, %v234
        %v236 = vrot.slane %v231, %v235
        %238 = vxpose.xlu0.b32.start [1/16] %v219, 128
        %239 = vxpose.xlu0.b32.cont [2/16] %v221, 128
        %240 = vxpose.xlu0.b32.cont [3/16] %v223, 128
        %241 = vxpose.xlu0.b32.cont [4/16] %v225, 128
        %242 = vxpose.xlu0.b32.cont [5/16] 0.0, 128
        %243 = vxpose.xlu0.b32.cont [6/16] 0.0, 128
        %244 = vxpose.xlu0.b32.cont [7/16] 0.0, 128
        %245 = vxpose.xlu0.b32.cont [8/16] 0.0, 128
        %246 = vxpose.xlu0.b32.cont [9/16] 0.0, 128
        %247 = vxpose.xlu0.b32.cont [10/16] 0.0, 128
        %248 = vxpose.xlu0.b32.cont [11/16] 0.0, 128
        %249 = vxpose.xlu0.b32.cont [12/16] 0.0, 128
        %250 = vxpose.xlu0.b32.cont [13/16] 0.0, 128
        %251 = vxpose.xlu0.b32.cont [14/16] 0.0, 128
        %252 = vxpose.xlu0.b32.cont [15/16] 0.0, 128
        %253 = vxpose.xlu0.b32.end [16/16] 0.0, 128
        %v254 = vpop.trf.xlu0
        %v255 = vpop.trf.xlu0
        %v256 = vpop.trf.xlu0
        %v257 = vpop.trf.xlu0
        %v258 = vpop.trf.xlu0
        %v259 = vpop.trf.xlu0
        %v260 = vpop.trf.xlu0
        %v261 = vpop.trf.xlu0
        %v262 = vpop.trf.xlu0
        %v263 = vpop.trf.xlu0
        %v264 = vpop.trf.xlu0
        %v265 = vpop.trf.xlu0
        %v266 = vpop.trf.xlu0
        %v267 = vpop.trf.xlu0
        %v268 = vpop.trf.xlu0
        %v269 = vpop.trf.xlu0
        %270 = vxpose.xlu0.b32.start [1/16] %v220, 128
        %271 = vxpose.xlu0.b32.cont [2/16] %v222, 128
        %272 = vxpose.xlu0.b32.cont [3/16] %v224, 128
        %273 = vxpose.xlu0.b32.cont [4/16] %v226, 128
        %274 = vxpose.xlu0.b32.cont [5/16] 0.0, 128
        %275 = vxpose.xlu0.b32.cont [6/16] 0.0, 128
        %276 = vxpose.xlu0.b32.cont [7/16] 0.0, 128
        %277 = vxpose.xlu0.b32.cont [8/16] 0.0, 128
        %278 = vxpose.xlu0.b32.cont [9/16] 0.0, 128
        %279 = vxpose.xlu0.b32.cont [10/16] 0.0, 128
        %280 = vxpose.xlu0.b32.cont [11/16] 0.0, 128
        %281 = vxpose.xlu0.b32.cont [12/16] 0.0, 128
        %282 = vxpose.xlu0.b32.cont [13/16] 0.0, 128
        %283 = vxpose.xlu0.b32.cont [14/16] 0.0, 128
        %284 = vxpose.xlu0.b32.cont [15/16] 0.0, 128
        %285 = vxpose.xlu0.b32.end [16/16] 0.0, 128
        %v286 = vpop.trf.xlu0
        %v287 = vpop.trf.xlu0
        %v288 = vpop.trf.xlu0
        %v289 = vpop.trf.xlu0
        %v290 = vpop.trf.xlu0
        %v291 = vpop.trf.xlu0
        %v292 = vpop.trf.xlu0
        %v293 = vpop.trf.xlu0
        %v294 = vpop.trf.xlu0
        %v295 = vpop.trf.xlu0
        %v296 = vpop.trf.xlu0
        %v297 = vpop.trf.xlu0
        %v298 = vpop.trf.xlu0
        %v299 = vpop.trf.xlu0
        %v300 = vpop.trf.xlu0
        %v301 = vpop.trf.xlu0
        %vm302 = vcmask 261120
        %v304 = vsel %vm302, %v254, 0
        %v307 = vsel %vm302, %v255, 0
        %v310 = vsel %vm302, %v256, 0
        %v313 = vsel %vm302, %v257, 0
        %v316 = vsel %vm302, %v258, 0
        %v319 = vsel %vm302, %v259, 0
        %v322 = vsel %vm302, %v260, 0
        %v325 = vsel %vm302, %v261, 0
        %v328 = vsel %vm302, %v262, 0
        %v331 = vsel %vm302, %v263, 0
        %v334 = vsel %vm302, %v264, 0
        %v337 = vsel %vm302, %v265, 0
        %v340 = vsel %vm302, %v266, 0
        %v343 = vsel %vm302, %v267, 0
        %v346 = vsel %vm302, %v268, 0
        %v349 = vsel %vm302, %v269, 0
        %v352 = vsel %vm302, %v286, 0
        %v355 = vsel %vm302, %v287, 0
        %v358 = vsel %vm302, %v288, 0
        %v361 = vsel %vm302, %v289, 0
        %v364 = vsel %vm302, %v290, 0
        %v367 = vsel %vm302, %v291, 0
        %v370 = vsel %vm302, %v292, 0
        %v373 = vsel %vm302, %v293, 0
        %v376 = vsel %vm302, %v294, 0
        %v379 = vsel %vm302, %v295, 0
        %v382 = vsel %vm302, %v296, 0
        %v385 = vsel %vm302, %v297, 0
        %v388 = vsel %vm302, %v298, 0
        %v391 = vsel %vm302, %v299, 0
        %v394 = vsel %vm302, %v300, 0
        %v397 = vsel %vm302, %v301, 0
        %399 = vmatprep.subr.mxu0 0.0
        %400 = vmatpush1.msra.mxu0 %v227
        %401 = vmatprep.subr.mxu0 0.0
        %402 = vmatpush1.msra.mxu0 %v228
        %403 = vmatprep.subr.mxu0 0.0
        %404 = vmatpush1.msra.mxu0 %v229
        %405 = vmatprep.subr.mxu0 0.0
        %406 = vmatpush1.msra.mxu0 %v230
        %407 = vmatprep.subr.mxu0 0.0
        %408 = vmatpush1.msra.mxu0 0.0
        %409 = vmatprep.subr.mxu0 0.0
        %410 = vmatpush1.msra.mxu0 0.0
        %411 = vmatprep.subr.mxu0 0.0
        %412 = vmatpush1.msra.mxu0 0.0
        %413 = vmatprep.subr.mxu0 0.0
        %414 = vmatpush1.msra.mxu0 0.0
        %415 = vmatprep.subr.mxu0 0.0
        %416 = vmatpush1.msra.mxu0 0.0
        %417 = vmatprep.subr.mxu0 0.0
        %418 = vmatpush1.msra.mxu0 0.0
        %419 = vmatprep.subr.mxu0 0.0
        %420 = vmatpush1.msra.mxu0 0.0
        %421 = vmatprep.subr.mxu0 0.0
        %422 = vmatpush1.msra.mxu0 0.0
        %423 = vmatprep.subr.mxu0 0.0
        %424 = vmatpush1.msra.mxu0 0.0
        %425 = vmatprep.subr.mxu0 0.0
        %426 = vmatpush1.msra.mxu0 0.0
        %427 = vmatprep.subr.mxu0 0.0
        %428 = vmatpush1.msra.mxu0 0.0
        %429 = vmatprep.subr.mxu0 0.0
        %430 = vmatpush1.msra.mxu0 0.0
        %431 = vmatprep.subr.mxu0 0.0
        %432 = vmatpush1.msra.mxu0 0.0
        %433 = vmatprep.subr.mxu0 0.0
        %434 = vmatpush1.msra.mxu0 0.0
        %435 = vmatprep.subr.mxu0 0.0
        %436 = vmatpush1.msra.mxu0 0.0
        %437 = vmatprep.subr.mxu0 0.0
        %438 = vmatpush1.msra.mxu0 0.0
        %439 = vmatprep.subr.mxu0 0.0
        %440 = vmatpush1.msra.mxu0 0.0
        %441 = vmatprep.subr.mxu0 0.0
        %442 = vmatpush1.msra.mxu0 0.0
        %443 = vmatprep.subr.mxu0 0.0
        %444 = vmatpush1.msra.mxu0 0.0
        %445 = vmatprep.subr.mxu0 0.0
        %446 = vmatpush1.msra.mxu0 0.0
        %447 = vmatprep.subr.mxu0 0.0
        %448 = vmatpush1.msra.mxu0 0.0
        %449 = vmatprep.subr.mxu0 0.0
        %450 = vmatpush1.msra.mxu0 0.0
        %451 = vmatprep.subr.mxu0 0.0
        %452 = vmatpush1.msra.mxu0 0.0
        %453 = vmatprep.subr.mxu0 0.0
        %454 = vmatpush1.msra.mxu0 0.0
        %455 = vmatprep.subr.mxu0 0.0
        %456 = vmatpush1.msra.mxu0 0.0
        %457 = vmatprep.subr.mxu0 0.0
        %458 = vmatpush1.msra.mxu0 0.0
        %459 = vmatprep.subr.mxu0 0.0
        %460 = vmatpush1.msra.mxu0 0.0
        %461 = vmatprep.subr.mxu0 0.0
        %462 = vmatpush1.msra.mxu0 0.0
        %463 = vmatprep.mubr.f32.mxu0 0.0
        %464 = vmatmul.mubr.f32.gmra.mrb[0].mxu0 %v304
        %v465 = vpop.f32.mrb[0].mxu0
        %v466 = vadd.f32 %v236, %v465
        %v467 = vpop.f32.mrb[0].mxu0
        %468 = vmatprep.mubr.f32.mxu0 0.0
        %469 = vmatmul.mubr.f32.gmra.mrb[0].mxu0 %v307
        %v470 = vpop.f32.mrb[0].mxu0
        %v471 = vadd.f32 %v236, %v470
        %v472 = vpop.f32.mrb[0].mxu0
        %473 = vmatprep.mubr.f32.mxu0 0.0
        %474 = vmatmul.mubr.f32.gmra.mrb[0].mxu0 %v310
        %v475 = vpop.f32.mrb[0].mxu0
        %v476 = vadd.f32 %v236, %v475
        %v477 = vpop.f32.mrb[0].mxu0
        %478 = vmatprep.mubr.f32.mxu0 0.0
        %479 = vmatmul.mubr.f32.gmra.mrb[0].mxu0 %v313
        %v480 = vpop.f32.mrb[0].mxu0
        %v481 = vadd.f32 %v236, %v480
        %v482 = vpop.f32.mrb[0].mxu0
        %483 = vmatprep.mubr.f32.mxu0 0.0
        %484 = vmatmul.mubr.f32.gmra.mrb[0].mxu0 %v316
        %v485 = vpop.f32.mrb[0].mxu0
        %v486 = vadd.f32 %v236, %v485
        %v487 = vpop.f32.mrb[0].mxu0
        %488 = vmatprep.mubr.f32.mxu0 0.0
        %489 = vmatmul.mubr.f32.gmra.mrb[0].mxu0 %v319
        %v490 = vpop.f32.mrb[0].mxu0
        %v491 = vadd.f32 %v236, %v490
        %v492 = vpop.f32.mrb[0].mxu0
        %493 = vmatprep.mubr.f32.mxu0 0.0
        %494 = vmatmul.mubr.f32.gmra.mrb[0].mxu0 %v322
        %v495 = vpop.f32.mrb[0].mxu0
        %v496 = vadd.f32 %v236, %v495
        %v497 = vpop.f32.mrb[0].mxu0
        %498 = vmatprep.mubr.f32.mxu0 0.0
        %499 = vmatmul.mubr.f32.gmra.mrb[0].mxu0 %v325
        %v500 = vpop.f32.mrb[0].mxu0
        %v501 = vadd.f32 %v236, %v500
        %v502 = vpop.f32.mrb[0].mxu0
        %503 = vmatprep.mubr.f32.mxu0 0.0
        %504 = vmatmul.mubr.f32.gmra.mrb[0].mxu0 %v328
        %v505 = vpop.f32.mrb[0].mxu0
        %v506 = vadd.f32 %v236, %v505
        %v507 = vpop.f32.mrb[0].mxu0
        %508 = vmatprep.mubr.f32.mxu0 0.0
        %509 = vmatmul.mubr.f32.gmra.mrb[0].mxu0 %v331
        %v510 = vpop.f32.mrb[0].mxu0
        %v511 = vadd.f32 %v236, %v510
        %v512 = vpop.f32.mrb[0].mxu0
        %513 = vmatprep.mubr.f32.mxu0 0.0
        %514 = vmatmul.mubr.f32.gmra.mrb[0].mxu0 %v334
        %v515 = vpop.f32.mrb[0].mxu0
        %v516 = vadd.f32 %v236, %v515
        %v517 = vpop.f32.mrb[0].mxu0
        %518 = vmatprep.mubr.f32.mxu0 0.0
        %519 = vmatmul.mubr.f32.gmra.mrb[0].mxu0 %v337
        %v520 = vpop.f32.mrb[0].mxu0
        %v521 = vadd.f32 %v236, %v520
        %v522 = vpop.f32.mrb[0].mxu0
        %523 = vmatprep.mubr.f32.mxu0 0.0
        %524 = vmatmul.mubr.f32.gmra.mrb[0].mxu0 %v340
        %v525 = vpop.f32.mrb[0].mxu0
        %v526 = vadd.f32 %v236, %v525
        %v527 = vpop.f32.mrb[0].mxu0
        %528 = vmatprep.mubr.f32.mxu0 0.0
        %529 = vmatmul.mubr.f32.gmra.mrb[0].mxu0 %v343
        %v530 = vpop.f32.mrb[0].mxu0
        %v531 = vadd.f32 %v236, %v530
        %v532 = vpop.f32.mrb[0].mxu0
        %533 = vmatprep.mubr.f32.mxu0 0.0
        %534 = vmatmul.mubr.f32.gmra.mrb[0].mxu0 %v346
        %v535 = vpop.f32.mrb[0].mxu0
        %v536 = vadd.f32 %v236, %v535
        %v537 = vpop.f32.mrb[0].mxu0
        %538 = vmatprep.mubr.f32.mxu0 0.0
        %539 = vmatmul.mubr.f32.gmra.mrb[0].mxu0 %v349
        %v540 = vpop.f32.mrb[0].mxu0
        %v541 = vadd.f32 %v236, %v540
        %v542 = vpop.f32.mrb[0].mxu0
        %543 = vmatprep.mubr.f32.mxu0 0.0
        %544 = vmatmul.mubr.f32.gmra.mrb[0].mxu0 %v352
        %v545 = vpop.f32.mrb[0].mxu0
        %v546 = vadd.f32 %v236, %v545
        %v547 = vpop.f32.mrb[0].mxu0
        %548 = vmatprep.mubr.f32.mxu0 0.0
        %549 = vmatmul.mubr.f32.gmra.mrb[0].mxu0 %v355
        %v550 = vpop.f32.mrb[0].mxu0
        %v551 = vadd.f32 %v236, %v550
        %v552 = vpop.f32.mrb[0].mxu0
        %553 = vmatprep.mubr.f32.mxu0 0.0
        %554 = vmatmul.mubr.f32.gmra.mrb[0].mxu0 %v358
        %v555 = vpop.f32.mrb[0].mxu0
        %v556 = vadd.f32 %v236, %v555
        %v557 = vpop.f32.mrb[0].mxu0
        %558 = vmatprep.mubr.f32.mxu0 0.0
        %559 = vmatmul.mubr.f32.gmra.mrb[0].mxu0 %v361
        %v560 = vpop.f32.mrb[0].mxu0
        %v561 = vadd.f32 %v236, %v560
        %v562 = vpop.f32.mrb[0].mxu0
        %563 = vmatprep.mubr.f32.mxu0 0.0
        %564 = vmatmul.mubr.f32.gmra.mrb[0].mxu0 %v364
        %v565 = vpop.f32.mrb[0].mxu0
        %v566 = vadd.f32 %v236, %v565
        %v567 = vpop.f32.mrb[0].mxu0
        %568 = vmatprep.mubr.f32.mxu0 0.0
        %569 = vmatmul.mubr.f32.gmra.mrb[0].mxu0 %v367
        %v570 = vpop.f32.mrb[0].mxu0
        %v571 = vadd.f32 %v236, %v570
        %v572 = vpop.f32.mrb[0].mxu0
        %573 = vmatprep.mubr.f32.mxu0 0.0
        %574 = vmatmul.mubr.f32.gmra.mrb[0].mxu0 %v370
        %v575 = vpop.f32.mrb[0].mxu0
        %v576 = vadd.f32 %v236, %v575
        %v577 = vpop.f32.mrb[0].mxu0
        %578 = vmatprep.mubr.f32.mxu0 0.0
        %579 = vmatmul.mubr.f32.gmra.mrb[0].mxu0 %v373
        %v580 = vpop.f32.mrb[0].mxu0
        %v581 = vadd.f32 %v236, %v580
        %v582 = vpop.f32.mrb[0].mxu0
        %583 = vmatprep.mubr.f32.mxu0 0.0
        %584 = vmatmul.mubr.f32.gmra.mrb[0].mxu0 %v376
        %v585 = vpop.f32.mrb[0].mxu0
        %v586 = vadd.f32 %v236, %v585
        %v587 = vpop.f32.mrb[0].mxu0
        %588 = vmatprep.mubr.f32.mxu0 0.0
        %589 = vmatmul.mubr.f32.gmra.mrb[0].mxu0 %v379
        %v590 = vpop.f32.mrb[0].mxu0
        %v591 = vadd.f32 %v236, %v590
        %v592 = vpop.f32.mrb[0].mxu0
        %593 = vmatprep.mubr.f32.mxu0 0.0
        %594 = vmatmul.mubr.f32.gmra.mrb[0].mxu0 %v382
        %v595 = vpop.f32.mrb[0].mxu0
        %v596 = vadd.f32 %v236, %v595
        %v597 = vpop.f32.mrb[0].mxu0
        %598 = vmatprep.mubr.f32.mxu0 0.0
        %599 = vmatmul.mubr.f32.gmra.mrb[0].mxu0 %v385
        %v600 = vpop.f32.mrb[0].mxu0
        %v601 = vadd.f32 %v236, %v600
        %v602 = vpop.f32.mrb[0].mxu0
        %603 = vmatprep.mubr.f32.mxu0 0.0
        %604 = vmatmul.mubr.f32.gmra.mrb[0].mxu0 %v388
        %v605 = vpop.f32.mrb[0].mxu0
        %v606 = vadd.f32 %v236, %v605
        %v607 = vpop.f32.mrb[0].mxu0
        %608 = vmatprep.mubr.f32.mxu0 0.0
        %609 = vmatmul.mubr.f32.gmra.mrb[0].mxu0 %v391
        %v610 = vpop.f32.mrb[0].mxu0
        %v611 = vadd.f32 %v236, %v610
        %v612 = vpop.f32.mrb[0].mxu0
        %613 = vmatprep.mubr.f32.mxu0 0.0
        %614 = vmatmul.mubr.f32.gmra.mrb[0].mxu0 %v394
        %v615 = vpop.f32.mrb[0].mxu0
        %v616 = vadd.f32 %v236, %v615
        %v617 = vpop.f32.mrb[0].mxu0
        %618 = vmatprep.mubr.f32.mxu0 0.0
        %619 = vmatmul.mubr.f32.gmra.mrb[0].mxu0 %v397
        %v620 = vpop.f32.mrb[0].mxu0
        %v621 = vadd.f32 %v236, %v620
        %v622 = vpop.f32.mrb[0].mxu0
        %623 = vdwg.mxu0
        %vm624 = vcmask 97280
        %625 = vst.msk [vmem:[%s217] sm:$0xff] %vm624, %v466
        %626 = vst.msk [vmem:[%s217 + $0x8] sm:$0xff] %vm624, %v471
        %627 = vst.msk [vmem:[%s217 + $0x10] sm:$0xff] %vm624, %v476
        %628 = vst.msk [vmem:[%s217 + $0x18] sm:$0xff] %vm624, %v481
        %629 = vst.msk [vmem:[%s217 + $0x20] sm:$0xff] %vm624, %v486
        %630 = vst.msk [vmem:[%s217 + $0x28] sm:$0xff] %vm624, %v491
        %631 = vst.msk [vmem:[%s217 + $0x30] sm:$0xff] %vm624, %v496
        %632 = vst.msk [vmem:[%s217 + $0x38] sm:$0xff] %vm624, %v501
        %633 = vst.msk [vmem:[%s217 + $0x40] sm:$0xff] %vm624, %v506
        %634 = vst.msk [vmem:[%s217 + $0x48] sm:$0xff] %vm624, %v511
        %635 = vst.msk [vmem:[%s217 + $0x50] sm:$0xff] %vm624, %v516
        %636 = vst.msk [vmem:[%s217 + $0x58] sm:$0xff] %vm624, %v521
        %637 = vst.msk [vmem:[%s217 + $0x60] sm:$0xff] %vm624, %v526
        %638 = vst.msk [vmem:[%s217 + $0x68] sm:$0xff] %vm624, %v531
        %639 = vst.msk [vmem:[%s217 + $0x70] sm:$0xff] %vm624, %v536
        %640 = vst.msk [vmem:[%s217 + $0x78] sm:$0xff] %vm624, %v541
        %641 = vst.msk [vmem:[%s217 + $0x80] sm:$0xff] %vm624, %v546
        %642 = vst.msk [vmem:[%s217 + $0x88] sm:$0xff] %vm624, %v551
        %643 = vst.msk [vmem:[%s217 + $0x90] sm:$0xff] %vm624, %v556
        %644 = vst.msk [vmem:[%s217 + $0x98] sm:$0xff] %vm624, %v561
        %645 = vst.msk [vmem:[%s217 + $0xa0] sm:$0xff] %vm624, %v566
        %646 = vst.msk [vmem:[%s217 + $0xa8] sm:$0xff] %vm624, %v571
        %647 = vst.msk [vmem:[%s217 + $0xb0] sm:$0xff] %vm624, %v576
        %648 = vst.msk [vmem:[%s217 + $0xb8] sm:$0xff] %vm624, %v581
        %649 = vst.msk [vmem:[%s217 + $0xc0] sm:$0xff] %vm624, %v586
        %650 = vst.msk [vmem:[%s217 + $0xc8] sm:$0xff] %vm624, %v591
        %651 = vst.msk [vmem:[%s217 + $0xd0] sm:$0xff] %vm624, %v596
        %652 = vst.msk [vmem:[%s217 + $0xd8] sm:$0xff] %vm624, %v601
        %653 = vst.msk [vmem:[%s217 + $0xe0] sm:$0xff] %vm624, %v606
        %654 = vst.msk [vmem:[%s217 + $0xe8] sm:$0xff] %vm624, %v611
        %655 = vst.msk [vmem:[%s217 + $0xf0] sm:$0xff] %vm624, %v616
        %656 = vst.msk [vmem:[%s217 + $0xf8] sm:$0xff] %vm624, %v621
        %s657 = smul.u32 32, %s22
        %p658 = scmp.lt.s32.totalorder %s21, 1
        %s659 = scalar_select %p658, %s21, 1
        %p660 = scmp.lt.s32.totalorder %s657, 31
        %s661 = scalar_select %p660, %s657, 31
        %s662 = smul.addr %s659, 32
        %s663 = sadd.s32 %s661, %s662
        %s664 = smul.addr %s663, 8
        %s665 = scalar_lea.vmem %s3, %s664
        // Predicated region
        $region37: #{tpu_custom_call.1} parent=31 // pred_check
          %p666 = pneg %p119
        $region38: #{tpu_custom_call.1} parent=31 // pred_check_branch
          %668 = sbr.rel (%p666) target = $region40
        $region39: #{tpu_custom_call.1} parent=31 // pred_region
          %s669 = smul.u32 32, %s22
        $region40: #{tpu_custom_call.1} parent=31 // pred_fallthru
          _
      $region32: #{tpu_custom_call.1} parent=5 // pred_fallthru
        _
      %p670 = scmp.le.s32.totalorder 2, %s12
      // Predicated region
      $region41: #{tpu_custom_call.1} parent=5 // pred_check
        %p671 = pneg %p670
      $region42: #{tpu_custom_call.1} parent=5 // pred_check_branch
        %673 = sbr.rel (%p671) target = $region44
      $region43: #{tpu_custom_call.1} parent=5 // pred_region
        %s674 = ssub.s32 %s12, 2
        // Predicated region
        $region45: #{tpu_custom_call.1} parent=43 // pred_check
          %p675 = pneg %p125
        $region46: #{tpu_custom_call.1} parent=43 // pred_check_branch
          %677 = sbr.rel (%p675) target = $region48
        $region47: #{tpu_custom_call.1} parent=43 // pred_region
          %s678 = smul.u32 32, %s24
          %p679 = scmp.lt.s32.totalorder %s23, 1
          %s680 = scalar_select %p679, %s23, 1
          %p681 = scmp.lt.s32.totalorder %s678, 31
          %s682 = scalar_select %p681, %s678, 31
          %s683 = smul.addr %s680, 32
          %s684 = sadd.s32 %s682, %s683
          %s685 = smul.addr %s684, 8
          %s686 = scalar_lea.vmem %s3, %s685
        $region48: #{tpu_custom_call.1} parent=43 // pred_fallthru
          _
      $region44: #{tpu_custom_call.1} parent=5 // pred_fallthru
        _
    $region6: #{tpu_custom_call.1} parent=1 // loop_footer
      %s16 = sadd.s32 1, %s12
    $region7: #{tpu_custom_call.1} parent=1 // loop_footer_branch
      %11 = sbr.rel target = $region3
    $region8: #{tpu_custom_call.1} parent=1 // loop_exit
      _
    %687 = vsyncpa [#allocation3], 1
    %s688 = scalar_lea.sflag [#allocation3], 1
    %689 = vsyncpa %s688, 1

</llo_original>
